<compile_context>
chip_gen: v6e
topology: v6e:2x2x1
jax: 0.10.0
libtpu: 0.0.40
codegen_flags: <defaults>
</compile_context>

<pallas_src>
import functools

import jax
import jax.numpy as jnp
from jax.experimental import pallas as pl
from jax.experimental.pallas import tpu as pltpu

_LN_EPS = 1e-5
_VMEM_LIMIT = 64 * 1024 * 1024  # explicit budget; per-step tiles stay far below v7x's 64 MiB


# ----------------------------------------------------------------------------- helpers
def _layernorm(x, gamma, beta):
    mu = jnp.mean(x, axis=-1, keepdims=True)
    var = jnp.mean(jnp.square(x - mu), axis=-1, keepdims=True)
    return (x - mu) * jax.lax.rsqrt(var + _LN_EPS) * gamma + beta


def _gelu_tanh(x):
    # TODO(synk): PyTorch nn.GELU() default is the exact erf formulation; the tanh
    # approximation is used here (guaranteed Mosaic lowering via EUP tanh).
    c = 0.7978845608028654  # sqrt(2/pi)
    return 0.5 * x * (1.0 + jnp.tanh(c * (x + 0.044715 * x * x * x)))


# ----------------------------------------------------------------------------- kernels
def _attn_prologue_kernel(x_ref, g_ref, b_ref, wse1_ref, wse2_ref, wqkv_ref, qkv_ref):
    x = x_ref[0]                                            # (N, dim) f32
    ln = _layernorm(x, g_ref[...], b_ref[...])              # PreNorm LayerNorm
    # SELayer: squeeze (mean over sequence) -> excite (Linear/ReLU/Linear/Sigmoid) -> scale
    se = jnp.mean(ln, axis=0, keepdims=True)                # (1, dim)
    se = jnp.maximum(
        jnp.dot(se, wse1_ref[...], preferred_element_type=jnp.float32), 0.0)
    se = jax.nn.sigmoid(
        jnp.dot(se, wse2_ref[...], preferred_element_type=jnp.float32))
    h = ln * se                                             # (N, dim) gated
    # QKV projection (bias=False), full-sequence matmul on the MXU
    qkv_ref[0] = jnp.dot(h, wqkv_ref[...],
                         preferred_element_type=jnp.float32).astype(qkv_ref.dtype)


def _attention_kernel(q_ref, k_ref, v_ref, o_ref, *, scale):
    q = q_ref[0, 0]                                         # (N, dim_head)
    k = k_ref[0, 0]
    v = v_ref[0, 0]
    dots = jax.lax.dot_general(
        q, k, (((1,), (1,)), ((), ())),
        preferred_element_type=jnp.float32) * scale         # (N, N) = q @ k^T * scale
    dots = dots - jnp.max(dots, axis=-1, keepdims=True)
    p = jnp.exp(dots)
    attn = p / jnp.sum(p, axis=-1, keepdims=True)
    o_ref[0, 0] = jnp.dot(attn, v,
                          preferred_element_type=jnp.float32).astype(o_ref.dtype)


def _out_proj_residual_kernel(a_ref, x_ref, w_ref, b_ref, o_ref):
    a = a_ref[0]                                            # (N, inner)
    y = jnp.dot(a, w_ref[...], preferred_element_type=jnp.float32) + b_ref[...]
    o_ref[0] = (x_ref[0] + y).astype(o_ref.dtype)           # residual add


def _ff_block_kernel(x_ref, g_ref, b_ref, w1_ref, b1_ref, w2_ref, b2_ref, o_ref):
    x = x_ref[0]                                            # (N, dim)
    ln = _layernorm(x, g_ref[...], b_ref[...])
    h = jnp.dot(ln, w1_ref[...], preferred_element_type=jnp.float32) + b1_ref[...]
    h = _gelu_tanh(h)
    y = jnp.dot(h, w2_ref[...], preferred_element_type=jnp.float32) + b2_ref[...]
    o_ref[0] = (x + y).astype(o_ref.dtype)                  # residual add


def _layernorm_kernel(x_ref, g_ref, b_ref, o_ref):
    o_ref[0] = _layernorm(x_ref[0], g_ref[...], b_ref[...]).astype(o_ref.dtype)


# ----------------------------------------------------------------------------- pallas_call wrappers
def _cparams(n_parallel):
    return pltpu.CompilerParams(
        dimension_semantics=("parallel",) * n_parallel,
        vmem_limit_bytes=_VMEM_LIMIT)


def _attn_prologue(x, gamma, beta, wse1_t, wse2_t, wqkv_t):
    B, N, dim = x.shape
    dse = wse1_t.shape[1]
    three_inner = wqkv_t.shape[1]
    return pl.pallas_call(
        _attn_prologue_kernel,
        out_shape=jax.ShapeDtypeStruct((B, N, three_inner), x.dtype),
        grid_spec=pltpu.PrefetchScalarGridSpec(
            num_scalar_prefetch=0,
            grid=(B,),
            in_specs=[
                pl.BlockSpec((1, N, dim), lambda b: (b, 0, 0)),
                pl.BlockSpec((1, dim), lambda b: (0, 0)),
                pl.BlockSpec((1, dim), lambda b: (0, 0)),
                pl.BlockSpec((dim, dse), lambda b: (0, 0)),
                pl.BlockSpec((dse, dim), lambda b: (0, 0)),
                pl.BlockSpec((dim, three_inner), lambda b: (0, 0)),
            ],
            out_specs=pl.BlockSpec((1, N, three_inner), lambda b: (b, 0, 0)),
        ),
        compiler_params=_cparams(1),
    )(x, gamma, beta, wse1_t, wse2_t, wqkv_t)


def _attention(q, k, v, scale):
    B, H, N, dh = q.shape
    kern = functools.partial(_attention_kernel, scale=scale)
    spec = pl.BlockSpec((1, 1, N, dh), lambda b, h: (b, h, 0, 0))
    return pl.pallas_call(
        kern,
        out_shape=jax.ShapeDtypeStruct((B, H, N, dh), q.dtype),
        grid_spec=pltpu.PrefetchScalarGridSpec(
            num_scalar_prefetch=0,
            grid=(B, H),
            in_specs=[spec, spec, spec],
            out_specs=spec,
        ),
        compiler_params=_cparams(2),
    )(q, k, v)


def _out_proj_residual(a, x, wout_t, bout):
    B, N, inner = a.shape
    dim = wout_t.shape[1]
    return pl.pallas_call(
        _out_proj_residual_kernel,
        out_shape=jax.ShapeDtypeStruct((B, N, dim), x.dtype),
        grid_spec=pltpu.PrefetchScalarGridSpec(
            num_scalar_prefetch=0,
            grid=(B,),
            in_specs=[
                pl.BlockSpec((1, N, inner), lambda b: (b, 0, 0)),
                pl.BlockSpec((1, N, dim), lambda b: (b, 0, 0)),
                pl.BlockSpec((inner, dim), lambda b: (0, 0)),
                pl.BlockSpec((1, dim), lambda b: (0, 0)),
            ],
            out_specs=pl.BlockSpec((1, N, dim), lambda b: (b, 0, 0)),
        ),
        compiler_params=_cparams(1),
    )(a, x, wout_t, bout)


def _ff_block(x, gamma, beta, w1_t, b1, w2_t, b2):
    B, N, dim = x.shape
    mlp_dim = w1_t.shape[1]
    return pl.pallas_call(
        _ff_block_kernel,
        out_shape=jax.ShapeDtypeStruct((B, N, dim), x.dtype),
        grid_spec=pltpu.PrefetchScalarGridSpec(
            num_scalar_prefetch=0,
            grid=(B,),
            in_specs=[
                pl.BlockSpec((1, N, dim), lambda b: (b, 0, 0)),
                pl.BlockSpec((1, dim), lambda b: (0, 0)),
                pl.BlockSpec((1, dim), lambda b: (0, 0)),
                pl.BlockSpec((dim, mlp_dim), lambda b: (0, 0)),
                pl.BlockSpec((1, mlp_dim), lambda b: (0, 0)),
                pl.BlockSpec((mlp_dim, dim), lambda b: (0, 0)),
                pl.BlockSpec((1, dim), lambda b: (0, 0)),
            ],
            out_specs=pl.BlockSpec((1, N, dim), lambda b: (b, 0, 0)),
        ),
        compiler_params=_cparams(1),
    )(x, gamma, beta, w1_t, b1, w2_t, b2)


def _final_layernorm(x, gamma, beta):
    B, N, dim = x.shape
    return pl.pallas_call(
        _layernorm_kernel,
        out_shape=jax.ShapeDtypeStruct((B, N, dim), x.dtype),
        grid_spec=pltpu.PrefetchScalarGridSpec(
            num_scalar_prefetch=0,
            grid=(B,),
            in_specs=[
                pl.BlockSpec((1, N, dim), lambda b: (b, 0, 0)),
                pl.BlockSpec((1, dim), lambda b: (0, 0)),
                pl.BlockSpec((1, dim), lambda b: (0, 0)),
            ],
            out_specs=pl.BlockSpec((1, N, dim), lambda b: (b, 0, 0)),
        ),
        compiler_params=_cparams(1),
    )(x, gamma, beta)


# ----------------------------------------------------------------------------- full forward
def vision_transformer_forward(x, params, *, heads, dim_head, mask=None):
    """x: (B, N, dim) f32. Mirrors Vision_Transformer.forward (mask=None, dropout=0)."""
    if mask is not None:
        # TODO(synk): attention mask path not implemented (module default is mask=None).
        raise NotImplementedError("mask is not supported")
    B, N, dim = x.shape
    inner = heads * dim_head
    scale = dim ** (-0.5)  # note: module uses dim ** -0.5, NOT dim_head ** -0.5
    for layer in params["layers"]:
        # --- Residual(PreNorm(Attention)) ---
        qkv = _attn_prologue(x, layer["ln1_g"], layer["ln1_b"],
                             layer["se_w1_t"], layer["se_w2_t"], layer["wqkv_t"])
        q, k, v = jnp.split(qkv, 3, axis=-1)

        def to_heads(t):
            return t.reshape(B, N, heads, dim_head).transpose(0, 2, 1, 3)

        o = _attention(to_heads(q), to_heads(k), to_heads(v), scale)
        o = o.transpose(0, 2, 1, 3).reshape(B, N, inner)
        x = _out_proj_residual(o, x, layer["wout_t"], layer["bout"])
        # --- Residual(PreNorm(FeedForward)) ---
        x = _ff_block(x, layer["ln2_g"], layer["ln2_b"],
                      layer["w1_t"], layer["b1"], layer["w2_t"], layer["b2"])
    # to_latent = Identity; mlp_head = LayerNorm(dim)
    return _final_layernorm(x, params["head_g"], params["head_b"])


# ----------------------------------------------------------------------------- pure-JAX reference
def _ln_ref(x, g, b):
    mu = jnp.mean(x, axis=-1, keepdims=True)
    var = jnp.mean(jnp.square(x - mu), axis=-1, keepdims=True)
    return (x - mu) * jax.lax.rsqrt(var + _LN_EPS) * g + b


def vision_transformer_ref(x, params, *, heads, dim_head):
    B, N, dim = x.shape
    inner = heads * dim_head
    scale = dim ** (-0.5)
    for layer in params["layers"]:
        ln = _ln_ref(x, layer["ln1_g"], layer["ln1_b"])
        se = jnp.mean(ln, axis=1)                               # (B, dim)
        se = jnp.maximum(se @ layer["se_w1_t"], 0.0)
        se = jax.nn.sigmoid(se @ layer["se_w2_t"])
        h = ln * se[:, None, :]
        qkv = h @ layer["wqkv_t"]
        q, k, v = jnp.split(qkv, 3, axis=-1)
        q = q.reshape(B, N, heads, dim_head).transpose(0, 2, 1, 3)
        k = k.reshape(B, N, heads, dim_head).transpose(0, 2, 1, 3)
        v = v.reshape(B, N, heads, dim_head).transpose(0, 2, 1, 3)
        dots = jnp.einsum("bhid,bhjd->bhij", q, k) * scale
        attn = jax.nn.softmax(dots, axis=-1)
        o = jnp.einsum("bhij,bhjd->bhid", attn, v)
        o = o.transpose(0, 2, 1, 3).reshape(B, N, inner)
        x = x + (o @ layer["wout_t"] + layer["bout"])
        ln = _ln_ref(x, layer["ln2_g"], layer["ln2_b"])
        hh = _gelu_tanh(ln @ layer["w1_t"] + layer["b1"])
        x = x + (hh @ layer["w2_t"] + layer["b2"])
    return _ln_ref(x, params["head_g"], params["head_b"])


# ----------------------------------------------------------------------------- params
def init_params(key, *, dim, depth, heads, dim_head, mlp_dim, reduction=16):
    inner = heads * dim_head
    dse = dim // reduction

    def linear(k, fan_in, shape):
        lim = 1.0 / (fan_in ** 0.5)
        return jax.random.uniform(k, shape, minval=-lim, maxval=lim, dtype=jnp.float32)

    layers = []
    for _ in range(depth):
        keys = jax.random.split(key, 15)
        key = keys[0]
        layers.append(dict(
            ln1_g=1.0 + 0.1 * jax.random.normal(keys[1], (1, dim), jnp.float32),
            ln1_b=0.1 * jax.random.normal(keys[2], (1, dim), jnp.float32),
            se_w1_t=linear(keys[3], dim, (dim, dse)),        # SE fc1 weight, pre-transposed
            se_w2_t=linear(keys[4], dse, (dse, dim)),        # SE fc2 weight, pre-transposed
            wqkv_t=linear(keys[5], dim, (dim, 3 * inner)),   # to_qkv weight, pre-transposed
            wout_t=linear(keys[6], inner, (inner, dim)),     # to_out[0] weight, pre-transposed
            bout=linear(keys[7], inner, (1, dim)),
            ln2_g=1.0 + 0.1 * jax.random.normal(keys[8], (1, dim), jnp.float32),
            ln2_b=0.1 * jax.random.normal(keys[9], (1, dim), jnp.float32),
            w1_t=linear(keys[10], dim, (dim, mlp_dim)),      # FF fc1 weight, pre-transposed
            b1=linear(keys[11], dim, (1, mlp_dim)),
            w2_t=linear(keys[12], mlp_dim, (mlp_dim, dim)),  # FF fc2 weight, pre-transposed
            b2=linear(keys[13], mlp_dim, (1, dim)),
        ))
    kh = jax.random.split(key, 3)
    return dict(
        layers=layers,
        head_g=1.0 + 0.1 * jax.random.normal(kh[1], (1, dim), jnp.float32),
        head_b=0.1 * jax.random.normal(kh[2], (1, dim), jnp.float32),
    )


if __name__ == "__main__":
    # Small, lane-friendly demo shapes (dim multiple of 128 -> lane-dense stores).
    B, N = 2, 16
    dim, depth, heads, dim_head, mlp_dim = 128, 2, 4, 32, 256

    key = jax.random.PRNGKey(0)
    kx, kp = jax.random.split(key)
    x = jax.random.normal(kx, (B, N, dim), dtype=jnp.float32)
    params = init_params(kp, dim=dim, depth=depth, heads=heads,
                         dim_head=dim_head, mlp_dim=mlp_dim)

    out = vision_transformer_forward(x, params, heads=heads, dim_head=dim_head)
    out = jax.block_until_ready(out)

    with jax.default_matmul_precision("highest"):
        ref = jax.block_until_ready(
            vision_transformer_ref(x, params, heads=heads, dim_head=dim_head))

    assert out.shape == (B, N, dim)
    max_err = float(jnp.max(jnp.abs(out - ref)))
    assert jnp.allclose(out, ref, atol=1e-3, rtol=1e-3), f"mismatch vs reference, max|diff|={max_err}"

    print("KERNEL_OK")
</pallas_src>

<mosaic_0001>
module attributes {stable_mosaic.version = 11 : i64} {
  func.func @_attn_prologue_kernel(%arg0: i32, %arg1: memref<1x16x128xf32, #tpu.memory_space<vmem>>, %arg2: memref<1x128xf32, #tpu.memory_space<vmem>>, %arg3: memref<1x128xf32, #tpu.memory_space<vmem>>, %arg4: memref<128x8xf32, #tpu.memory_space<vmem>>, %arg5: memref<8x128xf32, #tpu.memory_space<vmem>>, %arg6: memref<128x384xf32, #tpu.memory_space<vmem>>, %arg7: memref<1x16x384xf32, #tpu.memory_space<vmem>>) attributes {dimension_semantics = [#tpu.dimension_semantics<parallel>], iteration_bounds = array<i64: 2>, scalar_prefetch = 0 : i64, scratch_operands = 0 : i64, tpu.core_type = #tpu.core_type<tc>, window_params = [{transform_indices = @transform_0, window_bounds = array<i64: 1, 16, 128>}, {pipeline_mode = #tpu.pipeline_mode<synchronous>, transform_indices = @transform_1, window_bounds = array<i64: 1, 128>}, {pipeline_mode = #tpu.pipeline_mode<synchronous>, transform_indices = @transform_2, window_bounds = array<i64: 1, 128>}, {pipeline_mode = #tpu.pipeline_mode<synchronous>, transform_indices = @transform_3, window_bounds = array<i64: 128, 8>}, {pipeline_mode = #tpu.pipeline_mode<synchronous>, transform_indices = @transform_4, window_bounds = array<i64: 8, 128>}, {pipeline_mode = #tpu.pipeline_mode<synchronous>, transform_indices = @transform_5, window_bounds = array<i64: 128, 384>}, {transform_indices = @transform_6, window_bounds = array<i64: 1, 16, 384>}]} {
    %c0 = arith.constant 0 : index
    %c0_0 = arith.constant 0 : index
    %c0_1 = arith.constant 0 : index
    %0 = vector.load %arg1[%c0, %c0_0, %c0_1] : memref<1x16x128xf32, #tpu.memory_space<vmem>>, vector<1x16x128xf32>
    %1 = vector.shape_cast %0 : vector<1x16x128xf32> to vector<16x128xf32>
    %c0_2 = arith.constant 0 : index
    %c0_3 = arith.constant 0 : index
    %2 = vector.load %arg2[%c0_2, %c0_3] : memref<1x128xf32, #tpu.memory_space<vmem>>, vector<1x128xf32>
    %c0_4 = arith.constant 0 : index
    %c0_5 = arith.constant 0 : index
    %3 = vector.load %arg3[%c0_4, %c0_5] : memref<1x128xf32, #tpu.memory_space<vmem>>, vector<1x128xf32>
    %cst = arith.constant dense<0.000000e+00> : vector<16xf32>
    %4 = vector.multi_reduction <add>, %1, %cst [1] : vector<16x128xf32> to vector<16xf32>
    %5 = vector.shape_cast %4 : vector<16xf32> to vector<16x1xf32>
    %cst_6 = arith.constant 1.280000e+02 : f32
    %6 = vector.broadcast %cst_6 : f32 to vector<16x1xf32>
    %7 = arith.divf %5, %6 : vector<16x1xf32>
    %8 = vector.broadcast %7 : vector<16x1xf32> to vector<16x128xf32>
    %9 = arith.subf %1, %8 : vector<16x128xf32>
    %10 = arith.mulf %9, %9 : vector<16x128xf32>
    %cst_7 = arith.constant dense<0.000000e+00> : vector<16xf32>
    %11 = vector.multi_reduction <add>, %10, %cst_7 [1] : vector<16x128xf32> to vector<16xf32>
    %12 = vector.shape_cast %11 : vector<16xf32> to vector<16x1xf32>
    %cst_8 = arith.constant 1.280000e+02 : f32
    %13 = vector.broadcast %cst_8 : f32 to vector<16x1xf32>
    %14 = arith.divf %12, %13 : vector<16x1xf32>
    %15 = vector.broadcast %7 : vector<16x1xf32> to vector<16x128xf32>
    %16 = arith.subf %1, %15 : vector<16x128xf32>
    %cst_9 = arith.constant 9.99999974E-6 : f32
    %17 = vector.broadcast %cst_9 : f32 to vector<16x1xf32>
    %18 = arith.addf %14, %17 : vector<16x1xf32>
    %19 = math.rsqrt %18 : vector<16x1xf32>
    %20 = vector.broadcast %19 : vector<16x1xf32> to vector<16x128xf32>
    %21 = arith.mulf %16, %20 : vector<16x128xf32>
    %22 = vector.broadcast %2 : vector<1x128xf32> to vector<16x128xf32>
    %23 = arith.mulf %21, %22 : vector<16x128xf32>
    %24 = vector.broadcast %3 : vector<1x128xf32> to vector<16x128xf32>
    %25 = arith.addf %23, %24 : vector<16x128xf32>
    %cst_10 = arith.constant dense<0.000000e+00> : vector<128xf32>
    %26 = vector.multi_reduction <add>, %25, %cst_10 [0] : vector<16x128xf32> to vector<128xf32>
    %27 = vector.shape_cast %26 : vector<128xf32> to vector<1x128xf32>
    %cst_11 = arith.constant 1.600000e+01 : f32
    %28 = vector.broadcast %cst_11 : f32 to vector<1x128xf32>
    %29 = arith.divf %27, %28 : vector<1x128xf32>
    %c0_12 = arith.constant 0 : index
    %c0_13 = arith.constant 0 : index
    %30 = vector.load %arg4[%c0_12, %c0_13] : memref<128x8xf32, #tpu.memory_space<vmem>>, vector<128x8xf32>
    %cst_14 = arith.constant dense<0.000000e+00> : vector<1x8xf32>
    %31 = tpu.matmul %29, %30, %cst_14 {dimension_numbers = #tpu.dot_dimension_numbers<[1], [0], [0], [1], [0, 0, 1, 1], [], []>} : vector<1x128xf32>, vector<128x8xf32>, vector<1x8xf32> -> vector<1x8xf32>
    %cst_15 = arith.constant 0.000000e+00 : f32
    %32 = vector.broadcast %cst_15 : f32 to vector<1x8xf32>
    %33 = arith.maximumf %31, %32 : vector<1x8xf32>
    %c0_16 = arith.constant 0 : index
    %c0_17 = arith.constant 0 : index
    %34 = vector.load %arg5[%c0_16, %c0_17] : memref<8x128xf32, #tpu.memory_space<vmem>>, vector<8x128xf32>
    %cst_18 = arith.constant dense<0.000000e+00> : vector<1x128xf32>
    %35 = tpu.matmul %33, %34, %cst_18 {dimension_numbers = #tpu.dot_dimension_numbers<[1], [0], [0], [1], [0, 0, 1, 1], [], []>} : vector<1x8xf32>, vector<8x128xf32>, vector<1x128xf32> -> vector<1x128xf32>
    %36 = arith.negf %35 : vector<1x128xf32>
    %37 = math.exp %36 : vector<1x128xf32>
    %cst_19 = arith.constant 1.000000e+00 : f32
    %38 = vector.broadcast %cst_19 : f32 to vector<1x128xf32>
    %39 = arith.addf %38, %37 : vector<1x128xf32>
    %40 = arith.divf %38, %39 : vector<1x128xf32>
    %41 = vector.broadcast %40 : vector<1x128xf32> to vector<16x128xf32>
    %42 = arith.mulf %25, %41 : vector<16x128xf32>
    %c0_20 = arith.constant 0 : index
    %c0_21 = arith.constant 0 : index
    %43 = vector.load %arg6[%c0_20, %c0_21] : memref<128x384xf32, #tpu.memory_space<vmem>>, vector<128x384xf32>
    %cst_22 = arith.constant dense<0.000000e+00> : vector<16x384xf32>
    %44 = tpu.matmul %42, %43, %cst_22 {dimension_numbers = #tpu.dot_dimension_numbers<[1], [0], [0], [1], [0, 0, 1, 1], [], []>} : vector<16x128xf32>, vector<128x384xf32>, vector<16x384xf32> -> vector<16x384xf32>
    %c0_23 = arith.constant 0 : index
    %c0_24 = arith.constant 0 : index
    %c0_25 = arith.constant 0 : index
    %45 = vector.load %arg7[%c0_23, %c0_24, %c0_25] : memref<1x16x384xf32, #tpu.memory_space<vmem>>, vector<1x16x384xf32>
    %46 = vector.shape_cast %45 : vector<1x16x384xf32> to vector<16x384xf32>
    %47 = vector.shape_cast %44 : vector<16x384xf32> to vector<1x16x384xf32>
    tpu.vector_store %arg7[%c0_23, %c0_24, %c0_25], %47 {strides = array<i32>} : memref<1x16x384xf32, #tpu.memory_space<vmem>>, vector<1x16x384xf32>,
    return
  }
  func.func @transform_0(%arg0: i32) -> (i32, i32, i32) {
    %c0_i32 = arith.constant 0 : i32
    %c0_i32_0 = arith.constant 0 : i32
    %c0_i32_1 = arith.constant 0 : i32
    return %arg0, %c0_i32, %c0_i32_0 : i32, i32, i32
  }
  func.func @transform_1(%arg0: i32) -> (i32, i32) {
    %c0_i32 = arith.constant 0 : i32
    %c0_i32_0 = arith.constant 0 : i32
    %c0_i32_1 = arith.constant 0 : i32
    return %c0_i32, %c0_i32_0 : i32, i32
  }
  func.func @transform_2(%arg0: i32) -> (i32, i32) {
    %c0_i32 = arith.constant 0 : i32
    %c0_i32_0 = arith.constant 0 : i32
    %c0_i32_1 = arith.constant 0 : i32
    return %c0_i32, %c0_i32_0 : i32, i32
  }
  func.func @transform_3(%arg0: i32) -> (i32, i32) {
    %c0_i32 = arith.constant 0 : i32
    %c0_i32_0 = arith.constant 0 : i32
    %c0_i32_1 = arith.constant 0 : i32
    return %c0_i32, %c0_i32_0 : i32, i32
  }
  func.func @transform_4(%arg0: i32) -> (i32, i32) {
    %c0_i32 = arith.constant 0 : i32
    %c0_i32_0 = arith.constant 0 : i32
    %c0_i32_1 = arith.constant 0 : i32
    return %c0_i32, %c0_i32_0 : i32, i32
  }
  func.func @transform_5(%arg0: i32) -> (i32, i32) {
    %c0_i32 = arith.constant 0 : i32
    %c0_i32_0 = arith.constant 0 : i32
    %c0_i32_1 = arith.constant 0 : i32
    return %c0_i32, %c0_i32_0 : i32, i32
  }
  func.func @transform_6(%arg0: i32) -> (i32, i32, i32) {
    %c0_i32 = arith.constant 0 : i32
    %c0_i32_0 = arith.constant 0 : i32
    %c0_i32_1 = arith.constant 0 : i32
    return %arg0, %c0_i32, %c0_i32_0 : i32, i32, i32
  }
}

</mosaic_0001>

<llo_original>
// kernel: tpu_custom_call.1
$region0: #{tpu_custom_call.1}
  #allocation0 [shape = 'u32[]', space=smem, size = 0x4, offset = 0x4, fixed_abs, tag = 'smem constant byte address 0x4 - core index']
  #allocation1 [shape = 'u32[144,128]{1,0:T(1,128)}', space=vmem, size = 0x12000, scoped, tag = 'internal scratch']
  %s0 = inlined_call_operand.vmem [shape: f32[2,16,128], index: 0, kind: input, shape index: {}]
  %s1 = inlined_call_operand.vmem [shape: f32[1,128], index: 1, kind: input, shape index: {}]
  %s2 = inlined_call_operand.vmem [shape: f32[1,128], index: 2, kind: input, shape index: {}]
  %s3 = inlined_call_operand.vmem [shape: f32[128,8], index: 3, kind: input, shape index: {}]
  %s4 = inlined_call_operand.vmem [shape: f32[8,128], index: 4, kind: input, shape index: {}]
  %s5 = inlined_call_operand.hbm [shape: f32[128,384], index: 5, kind: input, shape index: {}]
  %s6 = inlined_call_operand.hbm [shape: f32[2,16,384], index: 6, kind: output, shape index: {}]
  %s7 = sld [smem:[#allocation0]]
  $region61: #{tpu_custom_call.1} parent=0
    _
  %s9 = ssub.s32 1, %s7
  %s10 = scalar_select 0, %s9, %s7
  $region1: #{tpu_custom_call.1} parent=0
    #allocation2 [shape = 'u8[196608]{0}', space=vmem, size = 0x30000, scoped, tag = 'input window, operand 5, single buffered']
    #allocation3 [shape = 's32[2]{0}', space=sflag, size = 0x8, scoped, tag = 'scoped memory for tpu_custom_call.1']
    #allocation4 [shape = 's32[2]{0}', space=sflag, size = 0x8, scoped, tag = 'scoped memory for tpu_custom_call.1']
    #allocation5 [shape = 'u8[49152]{0}', space=vmem, size = 0xc000, scoped, tag = 'output window, operand 0']
    %11 = vsyncpa [#allocation3], 0
    %12 = vsyncpa [#allocation4], 0
    %s13 = scalar_lea.sflag [#allocation4], 1
    %14 = vsyncpa %s13, 0
    loop: start=0, step=1, limit=4
    $region2: #{tpu_custom_call.1} parent=1 // loop_pre_header
      _
    $region3: #{tpu_custom_call.1} parent=1 // loop_header
      %s16 = sphi 0, %s20
      %p17 = scmp.ge.s32.totalorder %s16, 4
      %s26 = sphi 0, %s28
      %s29 = sphi 0, %s26
      %s30 = sphi 0, %s29
      %s46 = sphi 0, %s30
      %s50 = sphi 0, %s50
      %s52 = sphi 0, %s50
      %s53 = sphi 0, %s52
      %s67 = sphi 0, %s53
      %s71 = sphi 0, %s71
      %s73 = sphi 0, %s71
      %s74 = sphi 0, %s73
      %s88 = sphi 0, %s74
      %s92 = sphi 0, %s92
      %s94 = sphi 0, %s92
      %s95 = sphi 0, %s94
      %s109 = sphi 0, %s95
      %s113 = sphi 0, %s113
      %s115 = sphi 0, %s113
      %s116 = sphi 0, %s115
      %s130 = sphi 0, %s116
      %s134 = sphi 0, %s134
      %s136 = sphi 0, %s134
      %s137 = sphi 0, %s136
      %s151 = sphi 0, %s137
      %s157 = sphi 0, %s159
      %s160 = sphi 0, %s157
      %s161 = sphi 0, %s160
      %s177 = sphi 0, %s161
    $region4: #{tpu_custom_call.1} parent=1 // loop_header_branch
      %19 = sbr.rel (%p17) target = $region8
    $region5: #{tpu_custom_call.1} parent=1 // loop_body
      %s21 = ssub.s32 %s16, 1
      %s22 = ssub.s32 %s16, 2
      %s23 = sadd.s32 %s16, 1
      %s24 = ssub.s32 %s16, %s23
      %p25 = scmp.eq.s32.totalorder %s24, 0
      %s27 = sadd.s32 %s26, 1
      %s28 = scalar_select %p25, %s26, %s27
      %p31 = pneg %p25
      %p32 = scmp.eq.s32.totalorder %s16, 1
      %p33 = por %p31, %p32
      %p34 = scmp.ne.s32.totalorder %s26, %s29
      %p35 = scmp.eq.s32.totalorder %s16, 0
      %p36 = por %p34, %p35
      %p37 = scmp.ne.s32.totalorder %s26, %s29
      %p38 = scmp.eq.s32.totalorder %s21, 1
      %p39 = por %p37, %p38
      %p40 = scmp.ne.s32.totalorder %s29, %s30
      %p41 = scmp.eq.s32.totalorder %s21, 0
      %p42 = por %p40, %p41
      %p43 = scmp.ne.s32.totalorder %s29, %s30
      %p44 = scmp.eq.s32.totalorder %s22, 1
      %p45 = por %p43, %p44
      %p47 = scmp.ne.s32.totalorder %s30, %s46
      %p48 = scmp.eq.s32.totalorder %s22, 0
      %p49 = por %p47, %p48
      %s51 = sadd.s32 %s50, 1
      %p54 = scmp.eq.s32.totalorder %s16, 1
      %p55 = scmp.ne.s32.totalorder %s50, %s52
      %p56 = scmp.eq.s32.totalorder %s16, 0
      %p57 = por %p55, %p56
      %p58 = scmp.ne.s32.totalorder %s50, %s52
      %p59 = scmp.eq.s32.totalorder %s21, 1
      %p60 = por %p58, %p59
      %p61 = scmp.ne.s32.totalorder %s52, %s53
      %p62 = scmp.eq.s32.totalorder %s21, 0
      %p63 = por %p61, %p62
      %p64 = scmp.ne.s32.totalorder %s52, %s53
      %p65 = scmp.eq.s32.totalorder %s22, 1
      %p66 = por %p64, %p65
      %p68 = scmp.ne.s32.totalorder %s53, %s67
      %p69 = scmp.eq.s32.totalorder %s22, 0
      %p70 = por %p68, %p69
      %s72 = sadd.s32 %s71, 1
      %p75 = scmp.eq.s32.totalorder %s16, 1
      %p76 = scmp.ne.s32.totalorder %s71, %s73
      %p77 = scmp.eq.s32.totalorder %s16, 0
      %p78 = por %p76, %p77
      %p79 = scmp.ne.s32.totalorder %s71, %s73
      %p80 = scmp.eq.s32.totalorder %s21, 1
      %p81 = por %p79, %p80
      %p82 = scmp.ne.s32.totalorder %s73, %s74
      %p83 = scmp.eq.s32.totalorder %s21, 0
      %p84 = por %p82, %p83
      %p85 = scmp.ne.s32.totalorder %s73, %s74
      %p86 = scmp.eq.s32.totalorder %s22, 1
      %p87 = por %p85, %p86
      %p89 = scmp.ne.s32.totalorder %s74, %s88
      %p90 = scmp.eq.s32.totalorder %s22, 0
      %p91 = por %p89, %p90
      %s93 = sadd.s32 %s92, 1
      %p96 = scmp.eq.s32.totalorder %s16, 1
      %p97 = scmp.ne.s32.totalorder %s92, %s94
      %p98 = scmp.eq.s32.totalorder %s16, 0
      %p99 = por %p97, %p98
      %p100 = scmp.ne.s32.totalorder %s92, %s94
      %p101 = scmp.eq.s32.totalorder %s21, 1
      %p102 = por %p100, %p101
      %p103 = scmp.ne.s32.totalorder %s94, %s95
      %p104 = scmp.eq.s32.totalorder %s21, 0
      %p105 = por %p103, %p104
      %p106 = scmp.ne.s32.totalorder %s94, %s95
      %p107 = scmp.eq.s32.totalorder %s22, 1
      %p108 = por %p106, %p107
      %p110 = scmp.ne.s32.totalorder %s95, %s109
      %p111 = scmp.eq.s32.totalorder %s22, 0
      %p112 = por %p110, %p111
      %s114 = sadd.s32 %s113, 1
      %p117 = scmp.eq.s32.totalorder %s16, 1
      %p118 = scmp.ne.s32.totalorder %s113, %s115
      %p119 = scmp.eq.s32.totalorder %s16, 0
      %p120 = por %p118, %p119
      %p121 = scmp.ne.s32.totalorder %s113, %s115
      %p122 = scmp.eq.s32.totalorder %s21, 1
      %p123 = por %p121, %p122
      %p124 = scmp.ne.s32.totalorder %s115, %s116
      %p125 = scmp.eq.s32.totalorder %s21, 0
      %p126 = por %p124, %p125
      %p127 = scmp.ne.s32.totalorder %s115, %s116
      %p128 = scmp.eq.s32.totalorder %s22, 1
      %p129 = por %p127, %p128
      %p131 = scmp.ne.s32.totalorder %s116, %s130
      %p132 = scmp.eq.s32.totalorder %s22, 0
      %p133 = por %p131, %p132
      %s135 = sadd.s32 %s134, 1
      %p138 = scmp.eq.s32.totalorder %s16, 1
      %p139 = scmp.ne.s32.totalorder %s134, %s136
      %p140 = scmp.eq.s32.totalorder %s16, 0
      %p141 = por %p139, %p140
      %p142 = scmp.ne.s32.totalorder %s134, %s136
      %p143 = scmp.eq.s32.totalorder %s21, 1
      %p144 = por %p142, %p143
      %p145 = scmp.ne.s32.totalorder %s136, %s137
      %p146 = scmp.eq.s32.totalorder %s21, 0
      %p147 = por %p145, %p146
      %p148 = scmp.ne.s32.totalorder %s136, %s137
      %p149 = scmp.eq.s32.totalorder %s22, 1
      %p150 = por %p148, %p149
      %p152 = scmp.ne.s32.totalorder %s137, %s151
      %p153 = scmp.eq.s32.totalorder %s22, 0
      %p154 = por %p152, %p153
      %s155 = ssub.s32 %s16, %s23
      %p156 = scmp.eq.s32.totalorder %s155, 0
      %s158 = sadd.s32 %s157, 1
      %s159 = scalar_select %p156, %s157, %s158
      %p162 = pneg %p156
      %p163 = scmp.eq.s32.totalorder %s16, 1
      %p164 = por %p162, %p163
      %p165 = scmp.ne.s32.totalorder %s157, %s160
      %p166 = scmp.eq.s32.totalorder %s16, 0
      %p167 = por %p165, %p166
      %p168 = scmp.ne.s32.totalorder %s157, %s160
      %p169 = scmp.eq.s32.totalorder %s21, 1
      %p170 = por %p168, %p169
      %p171 = scmp.ne.s32.totalorder %s160, %s161
      %p172 = scmp.eq.s32.totalorder %s21, 0
      %p173 = por %p171, %p172
      %p174 = scmp.ne.s32.totalorder %s160, %s161
      %p175 = scmp.eq.s32.totalorder %s22, 1
      %p176 = por %p174, %p175
      %p178 = scmp.ne.s32.totalorder %s161, %s177
      %p179 = scmp.eq.s32.totalorder %s22, 0
      %p180 = por %p178, %p179
      %p181 = scmp.le.s32.totalorder 1, %s16
      %p182 = scmp.lt.s32.totalorder %s16, 3
      %p183 = pnand %p181, %p182
      %p184 = pneg %p183
      // Predicated region
      $region9: #{tpu_custom_call.1} parent=5 // pred_check
        _
      $region10: #{tpu_custom_call.1} parent=5 // pred_check_branch
        %186 = sbr.rel (%p183) target = $region12
      $region11: #{tpu_custom_call.1} parent=5 // pred_region
        %s187 = ssub.s32 %s16, 1
        // Predicated region
        $region13: #{tpu_custom_call.1} parent=11 // pred_check
          %p188 = pneg %p63
        $region14: #{tpu_custom_call.1} parent=11 // pred_check_branch
          %190 = sbr.rel (%p188) target = $region16
        $region15: #{tpu_custom_call.1} parent=11 // pred_region
          _
        $region16: #{tpu_custom_call.1} parent=11 // pred_fallthru
          _
        // Predicated region
        $region17: #{tpu_custom_call.1} parent=11 // pred_check
          %p191 = pneg %p84
        $region18: #{tpu_custom_call.1} parent=11 // pred_check_branch
          %193 = sbr.rel (%p191) target = $region20
        $region19: #{tpu_custom_call.1} parent=11 // pred_region
          _
        $region20: #{tpu_custom_call.1} parent=11 // pred_fallthru
          _
        // Predicated region
        $region21: #{tpu_custom_call.1} parent=11 // pred_check
          %p194 = pneg %p105
        $region22: #{tpu_custom_call.1} parent=11 // pred_check_branch
          %196 = sbr.rel (%p194) target = $region24
        $region23: #{tpu_custom_call.1} parent=11 // pred_region
          _
        $region24: #{tpu_custom_call.1} parent=11 // pred_fallthru
          _
        // Predicated region
        $region25: #{tpu_custom_call.1} parent=11 // pred_check
          %p197 = pneg %p126
        $region26: #{tpu_custom_call.1} parent=11 // pred_check_branch
          %199 = sbr.rel (%p197) target = $region28
        $region27: #{tpu_custom_call.1} parent=11 // pred_region
          _
        $region28: #{tpu_custom_call.1} parent=11 // pred_fallthru
          _
        // Predicated region
        $region29: #{tpu_custom_call.1} parent=11 // pred_check
          %p200 = pneg %p147
        $region30: #{tpu_custom_call.1} parent=11 // pred_check_branch
          %202 = sbr.rel (%p200) target = $region32
        $region31: #{tpu_custom_call.1} parent=11 // pred_region
          %s204 = ssub.s32 6144, 6144
          %205 = vsyncadd [#allocation3], %s204
          %s206 = sshll.u32 [#allocation2], 4
          %s207 = int_to_ptr.vmem [resolvable:$true] %s206
          %212 = dma.hbm_to_vmem [thread:$0]  %s5, 6144, %s207, [#allocation3], 384, 384, 24
        $region32: #{tpu_custom_call.1} parent=11 // pred_fallthru
          _
      $region12: #{tpu_custom_call.1} parent=5 // pred_fallthru
        _
      %p213 = scmp.lt.s32.totalorder %s16, 2
      // Predicated region
      $region33: #{tpu_custom_call.1} parent=5 // pred_check
        %p214 = pneg %p213
      $region34: #{tpu_custom_call.1} parent=5 // pred_check_branch
        %216 = sbr.rel (%p214) target = $region36
      $region35: #{tpu_custom_call.1} parent=5 // pred_region
        // Predicated region
        $region37: #{tpu_custom_call.1} parent=35 // pred_check
          %p217 = pneg %p36
        $region38: #{tpu_custom_call.1} parent=35 // pred_check_branch
          %219 = sbr.rel (%p217) target = $region40
        $region39: #{tpu_custom_call.1} parent=35 // pred_region
          %p220 = scmp.lt.s32.totalorder %s16, 1
          %s221 = scalar_select %p220, %s16, 1
          %s222 = smul.addr %s221, 2
          %s223 = smul.addr %s222, 8
          %s224 = scalar_lea.vmem %s0, %s223
        $region40: #{tpu_custom_call.1} parent=35 // pred_fallthru
          _
      $region36: #{tpu_custom_call.1} parent=5 // pred_fallthru
        _
      %p225 = scmp.le.s32.totalorder 1, %s16
      %p226 = scmp.lt.s32.totalorder %s16, 3
      %p227 = pnand %p225, %p226
      %p228 = pneg %p227
      // Predicated region
      $region41: #{tpu_custom_call.1} parent=5 // pred_check
        _
      $region42: #{tpu_custom_call.1} parent=5 // pred_check_branch
        %230 = sbr.rel (%p227) target = $region44
      $region43: #{tpu_custom_call.1} parent=5 // pred_region
        %s231 = ssub.s32 %s16, 1
        // Predicated region
        $region45: #{tpu_custom_call.1} parent=43 // pred_check
          %p232 = pneg %p147
        $region46: #{tpu_custom_call.1} parent=43 // pred_check_branch
          %234 = sbr.rel (%p232) target = $region48
        $region47: #{tpu_custom_call.1} parent=43 // pred_region
          %235 = dma.done [#allocation3], 6144
        $region48: #{tpu_custom_call.1} parent=43 // pred_fallthru
          _
        %p236 = scmp.lt.s32.totalorder %s21, 1
        %s237 = scalar_select %p236, %s21, 1
        %s238 = smul.addr %s237, 2
        %s239 = smul.addr %s238, 8
        %s240 = scalar_lea.vmem %s0, %s239
        %p241 = pneg %p42
        %p242 = pneg %p39
        %p243 = pneg %p63
        %p244 = pneg %p60
        %p245 = pneg %p84
        %p246 = pneg %p81
        %p247 = pneg %p105
        %p248 = pneg %p102
        %p249 = pneg %p126
        %p250 = pneg %p123
        %p251 = pneg %p147
        %p252 = pneg %p144
        %p253 = pneg %p173
        %p254 = pneg %p170
        %s255 = sand.u32 %s160, 1
        %s256 = scalar_lea.sflag [#allocation4], %s255
        %s257 = sand.u32 %s160, 1
        %s258 = smul.addr %s257, 48
        %s259 = scalar_lea.vmem [#allocation5], %s258
        %p260 = scmp.lt.s32.totalorder %s21, 1
        %s261 = scalar_select %p260, %s21, 1
        %s262 = smul.addr %s261, 2
        %s263 = smul.addr %s262, 8
        %s264 = scalar_lea.vmem %s0, %s263
        %v265 = vld [vmem:[%s264] sm:$0xff]
        %v266 = vld [vmem:[%s264 + $0x8] sm:$0xff]
        %v267 = vld [vmem:[%s1] sm:$0x1]
        %v268 = vld [vmem:[%s2] sm:$0x1]
        %269 = vadd.xlane.f32.xlu0 %v265
        %v270 = vpop.xlane.xlu0 %269
        %271 = vadd.xlane.f32.xlu0 %v266
        %v272 = vpop.xlane.xlu0 %271
        %v273 = vrcp.pop 128.0
        %v274 = vmul.f32 %v270, %v273
        %v275 = vmul.f32 %v272, %v273
        %v276 = vsub.f32 %v265, %v274
        %v277 = vsub.f32 %v266, %v275
        %v278 = vmul.f32 %v276, %v276
        %v279 = vmul.f32 %v277, %v277
        %280 = vadd.xlane.f32.xlu0 %v278
        %v281 = vpop.xlane.xlu0 %280
        %282 = vadd.xlane.f32.xlu0 %v279
        %v283 = vpop.xlane.xlu0 %282
        %v284 = vmul.f32 %v281, %v273
        %v285 = vmul.f32 %v283, %v273
        %v286 = vadd.f32 %v284, 1e-05
        %v287 = vadd.f32 %v285, 1e-05
        %v288 = vrsqrt.pop %v286
        %v289 = vrsqrt.pop %v287
        %v290 = vmul.f32 %v276, %v288
        %v291 = vmul.f32 %v277, %v289
        %v293 = vlaneseq
        %v294 = vshrl.u32 %v293, 7
        %v295 = vsub.s32 0, %v294
        %v296 = vrot.slane %v267, %v295
        %v298 = vmul.f32 %v290, %v296
        %v299 = vmul.f32 %v291, %v296
        %v301 = vlaneseq
        %v302 = vshrl.u32 %v301, 7
        %v303 = vsub.s32 0, %v302
        %v304 = vrot.slane %v268, %v303
        %v306 = vadd.f32 %v298, %v304
        %v307 = vadd.f32 %v299, %v304
        %v308 = vadd.f32 %v306, %v307
        %v309 = vrot.slane %v308, 4
        %v310 = vadd.f32 %v308, %v309
        %v311 = vrot.slane %v310, 2
        %v312 = vadd.f32 %v310, %v311
        %v313 = vrot.slane %v312, 1
        %v314 = vadd.f32 %v312, %v313
        %v315 = vrcp.pop 16.0
        %v316 = vmul.f32 %v314, %v315
        %v317 = vld [vmem:[%s3] sm:$0xff]
        %v318 = vld [vmem:[%s3 + $0x8] sm:$0xff]
        %v319 = vld [vmem:[%s3 + $0x10] sm:$0xff]
        %v320 = vld [vmem:[%s3 + $0x18] sm:$0xff]
        %v321 = vld [vmem:[%s3 + $0x20] sm:$0xff]
        %v322 = vld [vmem:[%s3 + $0x28] sm:$0xff]
        %v323 = vld [vmem:[%s3 + $0x30] sm:$0xff]
        %v324 = vld [vmem:[%s3 + $0x38] sm:$0xff]
        %v325 = vld [vmem:[%s3 + $0x40] sm:$0xff]
        %v326 = vld [vmem:[%s3 + $0x48] sm:$0xff]
        %v327 = vld [vmem:[%s3 + $0x50] sm:$0xff]
        %v328 = vld [vmem:[%s3 + $0x58] sm:$0xff]
        %v329 = vld [vmem:[%s3 + $0x60] sm:$0xff]
        %v330 = vld [vmem:[%s3 + $0x68] sm:$0xff]
        %v331 = vld [vmem:[%s3 + $0x70] sm:$0xff]
        %v332 = vld [vmem:[%s3 + $0x78] sm:$0xff]
        %333 = vmatprep.subr.mxu0 0.0
        %334 = vmatpush1.msra.mxu0 %v332
        %335 = vmatprep.subr.mxu0 0.0
        %336 = vmatpush1.msra.mxu0 %v331
        %337 = vmatprep.subr.mxu0 0.0
        %338 = vmatpush1.msra.mxu0 %v330
        %339 = vmatprep.subr.mxu0 0.0
        %340 = vmatpush1.msra.mxu0 %v329
        %341 = vmatprep.subr.mxu0 0.0
        %342 = vmatpush1.msra.mxu0 %v328
        %343 = vmatprep.subr.mxu0 0.0
        %344 = vmatpush1.msra.mxu0 %v327
        %345 = vmatprep.subr.mxu0 0.0
        %346 = vmatpush1.msra.mxu0 %v326
        %347 = vmatprep.subr.mxu0 0.0
        %348 = vmatpush1.msra.mxu0 %v325
        %349 = vmatprep.subr.mxu0 0.0
        %350 = vmatpush1.msra.mxu0 %v324
        %351 = vmatprep.subr.mxu0 0.0
        %352 = vmatpush1.msra.mxu0 %v323
        %353 = vmatprep.subr.mxu0 0.0
        %354 = vmatpush1.msra.mxu0 %v322
        %355 = vmatprep.subr.mxu0 0.0
        %356 = vmatpush1.msra.mxu0 %v321
        %357 = vmatprep.subr.mxu0 0.0
        %358 = vmatpush1.msra.mxu0 %v320
        %359 = vmatprep.subr.mxu0 0.0
        %360 = vmatpush1.msra.mxu0 %v319
        %361 = vmatprep.subr.mxu0 0.0
        %362 = vmatpush1.msra.mxu0 %v318
        %363 = vmatprep.subr.mxu0 0.0
        %364 = vmatpush1.msra.mxu0 %v317
        %365 = vmatprep.subr.mxu0 0.0
        %366 = vmatpush2.msra.mxu0 0.0
        %367 = vmatprep.subr.mxu0 0.0
        %368 = vmatpush2.msra.mxu0 0.0
        %369 = vmatprep.subr.mxu0 0.0
        %370 = vmatpush2.msra.mxu0 0.0
        %371 = vmatprep.subr.mxu0 0.0
        %372 = vmatpush2.msra.mxu0 0.0
        %373 = vmatprep.subr.mxu0 0.0
        %374 = vmatpush2.msra.mxu0 0.0
        %375 = vmatprep.subr.mxu0 0.0
        %376 = vmatpush2.msra.mxu0 0.0
        %377 = vmatprep.subr.mxu0 0.0
        %378 = vmatpush2.msra.mxu0 0.0
        %379 = vmatprep.subr.mxu0 0.0
        %380 = vmatpush2.msra.mxu0 0.0
        %381 = vmatprep.subr.mxu0 0.0
        %382 = vmatpush2.msra.mxu0 0.0
        %383 = vmatprep.subr.mxu0 0.0
        %384 = vmatpush2.msra.mxu0 0.0
        %385 = vmatprep.subr.mxu0 0.0
        %386 = vmatpush2.msra.mxu0 0.0
        %387 = vmatprep.subr.mxu0 0.0
        %388 = vmatpush2.msra.mxu0 0.0
        %389 = vmatprep.subr.mxu0 0.0
        %390 = vmatpush2.msra.mxu0 0.0
        %391 = vmatprep.subr.mxu0 0.0
        %392 = vmatpush2.msra.mxu0 0.0
        %393 = vmatprep.subr.mxu0 0.0
        %394 = vmatpush2.msra.mxu0 0.0
        %395 = vmatprep.subr.mxu0 0.0
        %396 = vmatpush2.msra.mxu0 0.0
        %397 = vmatprep.mubr.f32.mxu0 0.0
        %398 = vmatmul.mubr.f32.gmra.mxu0 %v316
        %v399 = vpop.f32.mrf.mxu0
        %v400 = vadd.f32 0.0, %v399
        %v401 = vpop.f32.mrf.mxu0
        %402 = vdwg.mxu0
        %v403 = vmax.f32 %v400, 0.0
        %v404 = vld [vmem:[%s4] sm:$0xff]
        %vm405 = vcmask 64512
        %v407 = vsel %vm405, %v403, 0
        %409 = vmatprep.subr.mxu0 0.0
        %410 = vmatpush1.msra.mxu0 0.0
        %411 = vmatprep.subr.mxu0 0.0
        %412 = vmatpush1.msra.mxu0 0.0
        %413 = vmatprep.subr.mxu0 0.0
        %414 = vmatpush1.msra.mxu0 0.0
        %415 = vmatprep.subr.mxu0 0.0
        %416 = vmatpush1.msra.mxu0 0.0
        %417 = vmatprep.subr.mxu0 0.0
        %418 = vmatpush1.msra.mxu0 0.0
        %419 = vmatprep.subr.mxu0 0.0
        %420 = vmatpush1.msra.mxu0 0.0
        %421 = vmatprep.subr.mxu0 0.0
        %422 = vmatpush1.msra.mxu0 0.0
        %423 = vmatprep.subr.mxu0 0.0
        %424 = vmatpush1.msra.mxu0 0.0
        %425 = vmatprep.subr.mxu0 0.0
        %426 = vmatpush1.msra.mxu0 0.0
        %427 = vmatprep.subr.mxu0 0.0
        %428 = vmatpush1.msra.mxu0 0.0
        %429 = vmatprep.subr.mxu0 0.0
        %430 = vmatpush1.msra.mxu0 0.0
        %431 = vmatprep.subr.mxu0 0.0
        %432 = vmatpush1.msra.mxu0 0.0
        %433 = vmatprep.subr.mxu0 0.0
        %434 = vmatpush1.msra.mxu0 0.0
        %435 = vmatprep.subr.mxu0 0.0
        %436 = vmatpush1.msra.mxu0 0.0
        %437 = vmatprep.subr.mxu0 0.0
        %438 = vmatpush1.msra.mxu0 0.0
        %439 = vmatprep.subr.mxu0 0.0
        %440 = vmatpush1.msra.mxu0 %v404
        %441 = vmatprep.subr.mxu0 0.0
        %442 = vmatpush2.msra.mxu0 0.0
        %443 = vmatprep.subr.mxu0 0.0
        %444 = vmatpush2.msra.mxu0 0.0
        %445 = vmatprep.subr.mxu0 0.0
        %446 = vmatpush2.msra.mxu0 0.0
        %447 = vmatprep.subr.mxu0 0.0
        %448 = vmatpush2.msra.mxu0 0.0
        %449 = vmatprep.subr.mxu0 0.0
        %450 = vmatpush2.msra.mxu0 0.0
        %451 = vmatprep.subr.mxu0 0.0
        %452 = vmatpush2.msra.mxu0 0.0
        %453 = vmatprep.subr.mxu0 0.0
        %454 = vmatpush2.msra.mxu0 0.0
        %455 = vmatprep.subr.mxu0 0.0
        %456 = vmatpush2.msra.mxu0 0.0
        %457 = vmatprep.subr.mxu0 0.0
        %458 = vmatpush2.msra.mxu0 0.0
        %459 = vmatprep.subr.mxu0 0.0
        %460 = vmatpush2.msra.mxu0 0.0
        %461 = vmatprep.subr.mxu0 0.0
        %462 = vmatpush2.msra.mxu0 0.0
        %463 = vmatprep.subr.mxu0 0.0
        %464 = vmatpush2.msra.mxu0 0.0
        %465 = vmatprep.subr.mxu0 0.0
        %466 = vmatpush2.msra.mxu0 0.0
        %467 = vmatprep.subr.mxu0 0.0
        %468 = vmatpush2.msra.mxu0 0.0
        %469 = vmatprep.subr.mxu0 0.0
        %470 = vmatpush2.msra.mxu0 0.0
        %471 = vmatprep.subr.mxu0 0.0
        %472 = vmatpush2.msra.mxu0 0.0
        %473 = vmatprep.mubr.f32.mxu0 0.0
        %474 = vmatmul.mubr.f32.gmra.mxu0 %v407
        %v475 = vpop.f32.mrf.mxu0
        %v476 = vadd.f32 0.0, %v475
        %v477 = vpop.f32.mrf.mxu0
        %478 = vdwg.mxu0
        %v479 = vxor.u32 %v476, 2147483648
        %v480 = vmul.f32 %v479, 1.442695
        %v481 = vpow.pop %v480
        %v482 = vadd.f32 %v481, 1.0
        %v483 = vrcp.pop %v482
        %v484 = vmul.f32 1.0, %v483
        %v485 = vlaneseq
        %v486 = vshrl.u32 %v485, 7
        %v487 = vsub.s32 0, %v486
        %v488 = vrot.slane %v484, %v487
        %v489 = vmul.f32 %v306, %v488
        %v490 = vmul.f32 %v307, %v488
        %v491 = vld [vmem:[#allocation2] sm:$0xff]
        %v492 = vld [vmem:[#allocation2 + $0x8] sm:$0xff]
        %v493 = vld [vmem:[#allocation2 + $0x10] sm:$0xff]
        %v494 = vld [vmem:[#allocation2 + $0x18] sm:$0xff]
        %v495 = vld [vmem:[#allocation2 + $0x20] sm:$0xff]
        %v496 = vld [vmem:[#allocation2 + $0x28] sm:$0xff]
        %v497 = vld [vmem:[#allocation2 + $0x30] sm:$0xff]
        %v498 = vld [vmem:[#allocation2 + $0x38] sm:$0xff]
        %v499 = vld [vmem:[#allocation2 + $0x40] sm:$0xff]
        %v500 = vld [vmem:[#allocation2 + $0x48] sm:$0xff]
        %v501 = vld [vmem:[#allocation2 + $0x50] sm:$0xff]
        %v502 = vld [vmem:[#allocation2 + $0x58] sm:$0xff]
        %v503 = vld [vmem:[#allocation2 + $0x60] sm:$0xff]
        %v504 = vld [vmem:[#allocation2 + $0x68] sm:$0xff]
        %v505 = vld [vmem:[#allocation2 + $0x70] sm:$0xff]
        %v506 = vld [vmem:[#allocation2 + $0x78] sm:$0xff]
        %v507 = vld [vmem:[#allocation2 + $0x80] sm:$0xff]
        %v508 = vld [vmem:[#allocation2 + $0x88] sm:$0xff]
        %v509 = vld [vmem:[#allocation2 + $0x90] sm:$0xff]
        %v510 = vld [vmem:[#allocation2 + $0x98] sm:$0xff]
        %v511 = vld [vmem:[#allocation2 + $0xa0] sm:$0xff]
        %v512 = vld [vmem:[#allocation2 + $0xa8] sm:$0xff]
        %v513 = vld [vmem:[#allocation2 + $0xb0] sm:$0xff]
        %v514 = vld [vmem:[#allocation2 + $0xb8] sm:$0xff]
        %v515 = vld [vmem:[#allocation2 + $0xc0] sm:$0xff]
        %v516 = vld [vmem:[#allocation2 + $0xc8] sm:$0xff]
        %v517 = vld [vmem:[#allocation2 + $0xd0] sm:$0xff]
        %v518 = vld [vmem:[#allocation2 + $0xd8] sm:$0xff]
        %v519 = vld [vmem:[#allocation2 + $0xe0] sm:$0xff]
        %v520 = vld [vmem:[#allocation2 + $0xe8] sm:$0xff]
        %v521 = vld [vmem:[#allocation2 + $0xf0] sm:$0xff]
        %v522 = vld [vmem:[#allocation2 + $0xf8] sm:$0xff]
        %v523 = vld [vmem:[#allocation2 + $0x100] sm:$0xff]
        %v524 = vld [vmem:[#allocation2 + $0x108] sm:$0xff]
        %v525 = vld [vmem:[#allocation2 + $0x110] sm:$0xff]
        %v526 = vld [vmem:[#allocation2 + $0x118] sm:$0xff]
        %v527 = vld [vmem:[#allocation2 + $0x120] sm:$0xff]
        %v528 = vld [vmem:[#allocation2 + $0x128] sm:$0xff]
        %v529 = vld [vmem:[#allocation2 + $0x130] sm:$0xff]
        %v530 = vld [vmem:[#allocation2 + $0x138] sm:$0xff]
        %v531 = vld [vmem:[#allocation2 + $0x140] sm:$0xff]
        %v532 = vld [vmem:[#allocation2 + $0x148] sm:$0xff]
        %v533 = vld [vmem:[#allocation2 + $0x150] sm:$0xff]
        %v534 = vld [vmem:[#allocation2 + $0x158] sm:$0xff]
        %v535 = vld [vmem:[#allocation2 + $0x160] sm:$0xff]
        %v536 = vld [vmem:[#allocation2 + $0x168] sm:$0xff]
        %v537 = vld [vmem:[#allocation2 + $0x170] sm:$0xff]
        %v538 = vld [vmem:[#allocation2 + $0x178] sm:$0xff]
        %539 = vmatprep.subr.mxu0 %v537
        %540 = vmatpush1.msra.mxu0 %v536
        %541 = vmatprep.subr.mxu0 %v534
        %542 = vmatpush1.msra.mxu0 %v533
        %543 = vmatprep.subr.mxu0 %v531
        %544 = vmatpush1.msra.mxu0 %v530
        %545 = vmatprep.subr.mxu0 %v528
        %546 = vmatpush1.msra.mxu0 %v527
        %547 = vmatprep.subr.mxu0 %v525
        %548 = vmatpush1.msra.mxu0 %v524
        %549 = vmatprep.subr.mxu0 %v522
        %550 = vmatpush1.msra.mxu0 %v521
        %551 = vmatprep.subr.mxu0 %v519
        %552 = vmatpush1.msra.mxu0 %v518
        %553 = vmatprep.subr.mxu0 %v516
        %554 = vmatpush1.msra.mxu0 %v515
        %555 = vmatprep.subr.mxu0 %v513
        %556 = vmatpush1.msra.mxu0 %v512
        %557 = vmatprep.subr.mxu0 %v510
        %558 = vmatpush1.msra.mxu0 %v509
        %559 = vmatprep.subr.mxu0 %v507
        %560 = vmatpush1.msra.mxu0 %v506
        %561 = vmatprep.subr.mxu0 %v504
        %562 = vmatpush1.msra.mxu0 %v503
        %563 = vmatprep.subr.mxu0 %v501
        %564 = vmatpush1.msra.mxu0 %v500
        %565 = vmatprep.subr.mxu0 %v498
        %566 = vmatpush1.msra.mxu0 %v497
        %567 = vmatprep.subr.mxu0 %v495
        %568 = vmatpush1.msra.mxu0 %v494
        %569 = vmatprep.subr.mxu0 %v492
        %570 = vmatpush1.msra.mxu0 %v491
        %571 = vmatprep.subr.mxu0 0.0
        %572 = vmatpush2.msra.mxu0 0.0
        %573 = vmatprep.subr.mxu0 0.0
        %574 = vmatpush2.msra.mxu0 0.0
        %575 = vmatprep.subr.mxu0 0.0
        %576 = vmatpush2.msra.mxu0 0.0
        %577 = vmatprep.subr.mxu0 0.0
        %578 = vmatpush2.msra.mxu0 0.0
        %579 = vmatprep.subr.mxu0 0.0
        %580 = vmatpush2.msra.mxu0 0.0
        %581 = vmatprep.subr.mxu0 0.0
        %582 = vmatpush2.msra.mxu0 0.0
        %583 = vmatprep.subr.mxu0 0.0
        %584 = vmatpush2.msra.mxu0 0.0
        %585 = vmatprep.subr.mxu0 0.0
        %586 = vmatpush2.msra.mxu0 0.0
        %587 = vmatprep.subr.mxu0 0.0
        %588 = vmatpush2.msra.mxu0 0.0
        %589 = vmatprep.subr.mxu0 0.0
        %590 = vmatpush2.msra.mxu0 0.0
        %591 = vmatprep.subr.mxu0 0.0
        %592 = vmatpush2.msra.mxu0 0.0
        %593 = vmatprep.subr.mxu0 0.0
        %594 = vmatpush2.msra.mxu0 0.0
        %595 = vmatprep.subr.mxu0 0.0
        %596 = vmatpush2.msra.mxu0 0.0
        %597 = vmatprep.subr.mxu0 0.0
        %598 = vmatpush2.msra.mxu0 0.0
        %599 = vmatprep.subr.mxu0 0.0
        %600 = vmatpush2.msra.mxu0 0.0
        %601 = vmatprep.subr.mxu0 0.0
        %602 = vmatpush2.msra.mxu0 0.0
        %603 = vmatprep.mubr.f32.mxu0 0.0
        %604 = vmatmul.mubr.f32.gmra.mxu0 %v489
        %v605 = vpop.f32.mrf.mxu0
        %v606 = vadd.f32 0.0, %v605
        %v607 = vpop.f32.mrf.mxu0
        %v608 = vadd.f32 0.0, %v607
        %609 = vmatprep.mubr.f32.mxu0 0.0
        %610 = vmatmul.mubr.f32.gmra.mxu0 %v490
        %v611 = vpop.f32.mrf.mxu0
        %v612 = vadd.f32 0.0, %v611
        %v613 = vpop.f32.mrf.mxu0
        %v614 = vadd.f32 0.0, %v613
        %615 = vdwg.mxu0
        %616 = vmatprep.subr.mxu0 0.0
        %617 = vmatpush1.msra.mxu0 %v538
        %618 = vmatprep.subr.mxu0 0.0
        %619 = vmatpush1.msra.mxu0 %v535
        %620 = vmatprep.subr.mxu0 0.0
        %621 = vmatpush1.msra.mxu0 %v532
        %622 = vmatprep.subr.mxu0 0.0
        %623 = vmatpush1.msra.mxu0 %v529
        %624 = vmatprep.subr.mxu0 0.0
        %625 = vmatpush1.msra.mxu0 %v526
        %626 = vmatprep.subr.mxu0 0.0
        %627 = vmatpush1.msra.mxu0 %v523
        %628 = vmatprep.subr.mxu0 0.0
        %629 = vmatpush1.msra.mxu0 %v520
        %630 = vmatprep.subr.mxu0 0.0
        %631 = vmatpush1.msra.mxu0 %v517
        %632 = vmatprep.subr.mxu0 0.0
        %633 = vmatpush1.msra.mxu0 %v514
        %634 = vmatprep.subr.mxu0 0.0
        %635 = vmatpush1.msra.mxu0 %v511
        %636 = vmatprep.subr.mxu0 0.0
        %637 = vmatpush1.msra.mxu0 %v508
        %638 = vmatprep.subr.mxu0 0.0
        %639 = vmatpush1.msra.mxu0 %v505
        %640 = vmatprep.subr.mxu0 0.0
        %641 = vmatpush1.msra.mxu0 %v502
        %642 = vmatprep.subr.mxu0 0.0
        %643 = vmatpush1.msra.mxu0 %v499
        %644 = vmatprep.subr.mxu0 0.0
        %645 = vmatpush1.msra.mxu0 %v496
        %646 = vmatprep.subr.mxu0 0.0
        %647 = vmatpush1.msra.mxu0 %v493
        %648 = vmatprep.subr.mxu0 0.0
        %649 = vmatpush2.msra.mxu0 0.0
        %650 = vmatprep.subr.mxu0 0.0
        %651 = vmatpush2.msra.mxu0 0.0
        %652 = vmatprep.subr.mxu0 0.0
        %653 = vmatpush2.msra.mxu0 0.0
        %654 = vmatprep.subr.mxu0 0.0
        %655 = vmatpush2.msra.mxu0 0.0
        %656 = vmatprep.subr.mxu0 0.0
        %657 = vmatpush2.msra.mxu0 0.0
        %658 = vmatprep.subr.mxu0 0.0
        %659 = vmatpush2.msra.mxu0 0.0
        %660 = vmatprep.subr.mxu0 0.0
        %661 = vmatpush2.msra.mxu0 0.0
        %662 = vmatprep.subr.mxu0 0.0
        %663 = vmatpush2.msra.mxu0 0.0
        %664 = vmatprep.subr.mxu0 0.0
        %665 = vmatpush2.msra.mxu0 0.0
        %666 = vmatprep.subr.mxu0 0.0
        %667 = vmatpush2.msra.mxu0 0.0
        %668 = vmatprep.subr.mxu0 0.0
        %669 = vmatpush2.msra.mxu0 0.0
        %670 = vmatprep.subr.mxu0 0.0
        %671 = vmatpush2.msra.mxu0 0.0
        %672 = vmatprep.subr.mxu0 0.0
        %673 = vmatpush2.msra.mxu0 0.0
        %674 = vmatprep.subr.mxu0 0.0
        %675 = vmatpush2.msra.mxu0 0.0
        %676 = vmatprep.subr.mxu0 0.0
        %677 = vmatpush2.msra.mxu0 0.0
        %678 = vmatprep.subr.mxu0 0.0
        %679 = vmatpush2.msra.mxu0 0.0
        %680 = vmatprep.mubr.f32.mxu0 0.0
        %681 = vmatmul.mubr.f32.gmra.mxu0 %v489
        %v682 = vpop.f32.mrf.mxu0
        %v683 = vadd.f32 0.0, %v682
        %v684 = vpop.f32.mrf.mxu0
        %685 = vmatprep.mubr.f32.mxu0 0.0
        %686 = vmatmul.mubr.f32.gmra.mxu0 %v490
        %v687 = vpop.f32.mrf.mxu0
        %v688 = vadd.f32 0.0, %v687
        %v689 = vpop.f32.mrf.mxu0
        %690 = vdwg.mxu0
        %691 = vst [vmem:[%s259] sm:$0xff] %v606
        %692 = vst [vmem:[%s259 + $0x8] sm:$0xff] %v608
        %693 = vst [vmem:[%s259 + $0x10] sm:$0xff] %v683
        %694 = vst [vmem:[%s259 + $0x18] sm:$0xff] %v612
        %695 = vst [vmem:[%s259 + $0x20] sm:$0xff] %v614
        %696 = vst [vmem:[%s259 + $0x28] sm:$0xff] %v688
        %s697 = sand.u32 %s160, 1
        %s698 = scalar_lea.sflag [#allocation4], %s697
        %s699 = sand.u32 %s160, 1
        %s700 = smul.addr %s699, 48
        %s701 = scalar_lea.vmem [#allocation5], %s700
        // Predicated region
        $region49: #{tpu_custom_call.1} parent=43 // pred_check
          %p702 = pneg %p170
        $region50: #{tpu_custom_call.1} parent=43 // pred_check_branch
          %704 = sbr.rel (%p702) target = $region52
        $region51: #{tpu_custom_call.1} parent=43 // pred_region
          %s706 = ssub.s32 768, 768
          %707 = vsyncadd %s698, %s706
          %s708 = smul.addr %s21, 6
          %s709 = smul.addr %s708, 128
          %s710 = scalar_lea.hbm %s6, %s709
          %s711 = sshll.u32 %s701, 4
          %s712 = int_to_ptr.vmem [resolvable:$true] %s711
          %717 = dma.vmem_to_hbm [thread:$0]  %s712, 768, %s710, %s698, 384, 384, 24
        $region52: #{tpu_custom_call.1} parent=43 // pred_fallthru
          _
      $region44: #{tpu_custom_call.1} parent=5 // pred_fallthru
        _
      %p718 = scmp.le.s32.totalorder 2, %s16
      // Predicated region
      $region53: #{tpu_custom_call.1} parent=5 // pred_check
        %p719 = pneg %p718
      $region54: #{tpu_custom_call.1} parent=5 // pred_check_branch
        %721 = sbr.rel (%p719) target = $region56
      $region55: #{tpu_custom_call.1} parent=5 // pred_region
        %s722 = ssub.s32 %s16, 2
        // Predicated region
        $region57: #{tpu_custom_call.1} parent=55 // pred_check
          %p723 = pneg %p176
        $region58: #{tpu_custom_call.1} parent=55 // pred_check_branch
          %725 = sbr.rel (%p723) target = $region60
        $region59: #{tpu_custom_call.1} parent=55 // pred_region
          %s726 = sand.u32 %s161, 1
          %s727 = scalar_lea.sflag [#allocation4], %s726
          %s728 = sand.u32 %s161, 1
          %s729 = smul.addr %s728, 48
          %s730 = scalar_lea.vmem [#allocation5], %s729
          %731 = dma.done %s727, 768
        $region60: #{tpu_custom_call.1} parent=55 // pred_fallthru
          _
      $region56: #{tpu_custom_call.1} parent=5 // pred_fallthru
        _
    $region6: #{tpu_custom_call.1} parent=1 // loop_footer
      %s20 = sadd.s32 1, %s16
    $region7: #{tpu_custom_call.1} parent=1 // loop_footer_branch
      %15 = sbr.rel target = $region3
    $region8: #{tpu_custom_call.1} parent=1 // loop_exit
      _
    %732 = vsyncpa [#allocation3], 1
    %s733 = scalar_lea.sflag [#allocation3], 1
    %734 = vsyncpa %s733, 1
    %735 = vsyncpa [#allocation4], 1
    %s736 = scalar_lea.sflag [#allocation4], 1
    %737 = vsyncpa %s736, 1

</llo_original>
